<compile_context>
chip_gen: v7x
topology: tpu7x:2x2x1
jax: 0.10.0
libtpu: 0.0.40
codegen_flags: <defaults>
</compile_context>

<pallas_src>
import jax
import jax.numpy as jnp
from jax.experimental import pallas as pl
from jax.experimental.pallas import tpu as pltpu

B = 2      # batch
L = 256    # audio_length (small stand-in for 16000)
H = 128    # hidden width
D = 32     # latent dim
DP = 128   # latent dim padded to a full lane tile (lane-dense z / Wz K-dim)
N = 128    # number of decoded coordinates
C = 8      # coordinate feature dim (Fourier features of time)

# bf16 elementwise math is native on v6e/v7x VPUs; v5e (and older) have no
# bf16 VALU, so keep the decoder hidden path f32 there.  MXU operands are
# bf16 on every generation (MXU is bf16-native everywhere).
_KIND = jax.devices()[0].device_kind.lower()
HIDDEN_DTYPE = jnp.bfloat16 if ("v6" in _KIND or "v7" in _KIND) else jnp.float32


def _pick_tk(l):
    """Encoder K-tile: stream W1 in <=2048-wide chunks so BlockSpec can
    double-buffer the dominant weight DMA behind the MXU at production L."""
    if l <= 2048:
        return l
    for tk in range(2048, 127, -128):
        if l % tk == 0:
            return tk
    return l  # TODO(synk): handle L with no nice 128-multiple divisor (pad K)


TK = _pick_tk(L)
KT = L // TK


# ---------------------------------------------------------------------------
# Fused kernel, grid=(KT,) over the encoder reduction axis K (= audio length):
#   encoder : acc += x_tile @ W1_tile            (every step, f32 accumulator)
#             h1 = relu(acc + b1) ; z = h1 @ W2 + b2        (last step)
#   decoder : h  = relu(coords @ Wc + (z @ Wz + bh)[per-batch bias])
#             x_recon[b, n] = sum_h h[b, n, h] * wo[h] + bo (last step)
# ---------------------------------------------------------------------------
def _autoencoder_kernel(x_ref, c_ref,
                        w1_ref, b1_ref, w2_ref, b2_ref,
                        wc_ref, wz_ref, bh_ref, wo_ref, bo_ref,
                        xrec_ref, z_ref, acc_ref):
    k = pl.program_id(0)

    # ----- encoder: K-tiled x @ W1 accumulation (bf16 operands, f32 acc) ----
    @pl.when(k == 0)
    def _():
        acc_ref[...] = jnp.zeros_like(acc_ref)

    acc_ref[...] += jnp.dot(x_ref[...], w1_ref[...],
                            preferred_element_type=jnp.float32)        # [B, H]

    # ----- finalize encoder + full decoder on the last K step ---------------
    @pl.when(k == pl.num_programs(0) - 1)
    def _():
        h1 = jnp.maximum(acc_ref[...] + b1_ref[...], 0.0)              # [B, H] f32
        z_full = jnp.dot(h1.astype(w2_ref.dtype), w2_ref[...],
                         preferred_element_type=jnp.float32) + b2_ref[...]  # [B, DP]
        z_ref[...] = z_full.astype(z_ref.dtype)                        # lane-dense

        # decoder: whole batch in one pass
        cwc = jnp.dot(c_ref[...], wc_ref[...],
                      preferred_element_type=jnp.float32)              # [B*N, H]
        # z path hoisted to a per-batch bias; Wz is zero-padded to DP rows so
        # z_full feeds the MXU with a full 128-lane K and no lane slice.
        zb = jnp.dot(z_full.astype(wz_ref.dtype), wz_ref[...],
                     preferred_element_type=jnp.float32) + bh_ref[...]  # [B, H]

        h = (cwc.reshape(B, N, H) + zb[:, None, :]).astype(HIDDEN_DTYPE)
        h = jnp.maximum(h, jnp.zeros((), HIDDEN_DTYPE))                # [B, N, H]

        # lane-dense output projection: VPU multiply + lane reduce (f32 accum)
        prod = h * wo_ref[...][None, :, :]
        o = jnp.sum(prod.astype(jnp.float32), axis=-1) + bo_ref[0, 0]  # [B, N]
        xrec_ref[...] = o.astype(xrec_ref.dtype)


@jax.jit
def autoencoder_forward(x, coordinates, enc_params, dec_params):
    w1, b1, w2, b2 = enc_params
    wc, wz, bh, wo, bo = dec_params

    # layout / dtype plumbing on the host side (cheap relative to the kernel):
    x2d = x.reshape(B, L).astype(jnp.bfloat16)               # NCW audio -> [B,L]
    c2d = coordinates.reshape(B * N, C).astype(jnp.bfloat16)  # [B,N,C] -> [B*N,C]
    w1b = w1.astype(jnp.bfloat16)
    # pad latent dim D -> DP=128 with zeros: lane-dense z output (no masked
    # stores) and a full-K z@Wz matmul; padded columns/rows are exact zeros.
    w2p = jnp.zeros((H, DP), jnp.bfloat16).at[:, :D].set(w2.astype(jnp.bfloat16))
    b2p = jnp.zeros((1, DP), jnp.float32).at[:, :D].set(b2)
    wcb = wc.astype(jnp.bfloat16)
    wzp = jnp.zeros((DP, H), jnp.bfloat16).at[:D, :].set(wz.astype(jnp.bfloat16))
    wo_row = wo.reshape(1, H).astype(HIDDEN_DTYPE)            # [H,1] -> [1,H]

    xrec2d, z_pad = pl.pallas_call(
        _autoencoder_kernel,
        out_shape=(jax.ShapeDtypeStruct((B, N), jnp.float32),   # lane-dense
                   jax.ShapeDtypeStruct((B, DP), jnp.float32)),  # lane-dense
        grid=(KT,),
        in_specs=[
            pl.BlockSpec((B, TK), lambda k: (0, k)),             # x   (K-tiled)
            pl.BlockSpec((B * N, C), lambda k: (0, 0)),          # coords
            pl.BlockSpec((TK, H), lambda k: (k, 0)),             # W1  (K-tiled)
            pl.BlockSpec((1, H), lambda k: (0, 0)),              # b1
            pl.BlockSpec((H, DP), lambda k: (0, 0)),             # W2  (D padded)
            pl.BlockSpec((1, DP), lambda k: (0, 0)),             # b2  (D padded)
            pl.BlockSpec((C, H), lambda k: (0, 0)),              # Wc
            pl.BlockSpec((DP, H), lambda k: (0, 0)),             # Wz  (D padded)
            pl.BlockSpec((1, H), lambda k: (0, 0)),              # bh
            pl.BlockSpec((1, H), lambda k: (0, 0)),              # wo (row form)
            pl.BlockSpec(memory_space=pltpu.MemorySpace.SMEM),   # bo scalar
        ],
        out_specs=(pl.BlockSpec((B, N), lambda k: (0, 0)),
                   pl.BlockSpec((B, DP), lambda k: (0, 0))),
        scratch_shapes=[pltpu.VMEM((B, H), jnp.float32)],        # encoder acc
        compiler_params=pltpu.CompilerParams(
            dimension_semantics=("arbitrary",)),                 # K = reduction
    )(x2d, c2d, w1b, b1, w2p, b2p, wcb, wzp, bh, wo_row, bo)

    return xrec2d.reshape(B, N, 1), z_pad[:, :D]


# ---------------------------------------------------------------------------
# References
# ---------------------------------------------------------------------------
def reference_forward_f32(x, coordinates, enc_params, dec_params):
    """Original pure-f32 module semantics."""
    w1, b1, w2, b2 = enc_params
    wc, wz, bh, wo, bo = dec_params
    x2d = x.reshape(B, L)
    h1 = jnp.maximum(x2d @ w1 + b1, 0.0)
    z = h1 @ w2 + b2
    hd = jnp.maximum(coordinates @ wc + (z @ wz)[:, None, :] + bh, 0.0)
    x_recon = hd @ wo + bo
    return x_recon, z


def reference_forward_mirrored(x, coordinates, enc_params, dec_params):
    """Pure-JAX reference mirroring the kernel's dtype policy (bf16 MXU
    operands, f32 accumulation, HIDDEN_DTYPE decoder hidden path)."""
    w1, b1, w2, b2 = enc_params
    wc, wz, bh, wo, bo = dec_params
    bf = lambda a: a.astype(jnp.bfloat16).astype(jnp.float32)
    x2d = bf(x.reshape(B, L))
    h1 = jnp.maximum(x2d @ bf(w1) + b1, 0.0)
    z = bf(h1) @ bf(w2) + b2
    cwc = bf(coordinates) @ bf(wc)
    zb = bf(z) @ bf(wz) + bh
    h = (cwc + zb[:, None, :]).astype(HIDDEN_DTYPE)
    h = jnp.maximum(h, jnp.zeros((), HIDDEN_DTYPE))
    prod = h * wo.reshape(1, 1, H).astype(HIDDEN_DTYPE)
    o = jnp.sum(prod.astype(jnp.float32), axis=-1) + bo[0, 0]
    return o[..., None], z


if __name__ == "__main__":
    key = jax.random.PRNGKey(0)
    ks = jax.random.split(key, 8)

    # deterministic inputs
    x = jax.random.normal(ks[0], (B, 1, L), jnp.float32)        # NCW audio
    t = jnp.linspace(-1.0, 1.0, N)
    freqs = 2.0 ** jnp.arange(C // 2, dtype=jnp.float32)
    ff = t[:, None] * freqs[None, :] * jnp.pi
    coords_single = jnp.concatenate([jnp.sin(ff), jnp.cos(ff)], axis=-1)  # [N, C]
    coordinates = jnp.broadcast_to(coords_single[None], (B, N, C)).astype(jnp.float32)

    # deterministic parameters (fan-in scaled normal, zero biases)
    def init(k, shape, fan_in):
        return jax.random.normal(k, shape, jnp.float32) / jnp.sqrt(float(fan_in))

    enc_params = (
        init(ks[1], (L, H), L), jnp.zeros((1, H), jnp.float32),
        init(ks[2], (H, D), H), jnp.zeros((1, D), jnp.float32),
    )
    dec_params = (
        init(ks[3], (C, H), C + D), init(ks[4], (D, H), C + D),
        jnp.zeros((1, H), jnp.float32),
        init(ks[5], (H, 1), H), jnp.zeros((1, 1), jnp.float32),
    )

    x_recon, z = autoencoder_forward(x, coordinates, enc_params, dec_params)
    jax.block_until_ready((x_recon, z))

    xr_m, z_m = reference_forward_mirrored(x, coordinates, enc_params, dec_params)
    xr_f, z_f = reference_forward_f32(x, coordinates, enc_params, dec_params)

    assert x_recon.shape == (B, N, 1) and z.shape == (B, D)
    # tight check against a reference with the same bf16/f32 dtype policy
    assert jnp.allclose(z, z_m, rtol=1e-2, atol=1e-2)
    assert jnp.allclose(x_recon, xr_m, rtol=1e-2, atol=1e-2)
    # looser sanity check against original pure-f32 semantics (bf16 storage error)
    assert jnp.allclose(z, z_f, rtol=5e-2, atol=5e-2)
    assert jnp.allclose(x_recon, xr_f, rtol=5e-2, atol=5e-2)

    print("KERNEL_OK")
</pallas_src>

<mosaic_0001>
module attributes {stable_mosaic.version = 11 : i64} {
  func.func @_autoencoder_kernel(%arg0: i32, %arg1: memref<2x256xbf16, #tpu.memory_space<vmem>>, %arg2: memref<256x8xbf16, #tpu.memory_space<vmem>>, %arg3: memref<256x128xbf16, #tpu.memory_space<vmem>>, %arg4: memref<1x128xf32, #tpu.memory_space<vmem>>, %arg5: memref<128x128xbf16, #tpu.memory_space<vmem>>, %arg6: memref<1x128xf32, #tpu.memory_space<vmem>>, %arg7: memref<8x128xbf16, #tpu.memory_space<vmem>>, %arg8: memref<128x128xbf16, #tpu.memory_space<vmem>>, %arg9: memref<1x128xf32, #tpu.memory_space<vmem>>, %arg10: memref<1x128xf32, #tpu.memory_space<vmem>>, %arg11: memref<1x1xf32, #tpu.memory_space<smem>>, %arg12: memref<2x128xf32, #tpu.memory_space<vmem>>, %arg13: memref<2x128xf32, #tpu.memory_space<vmem>>, %arg14: memref<2x128xf32, #tpu.memory_space<vmem>>) attributes {dimension_semantics = [#tpu.dimension_semantics<arbitrary>], iteration_bounds = array<i64: 1>, scalar_prefetch = 0 : i64, scratch_operands = 1 : i64, tpu.core_type = #tpu.core_type<tc>, window_params = [{transform_indices = @transform_0, window_bounds = array<i64: 2, 256>}, {pipeline_mode = #tpu.pipeline_mode<synchronous>, transform_indices = @transform_1, window_bounds = array<i64: 256, 8>}, {transform_indices = @transform_2, window_bounds = array<i64: 256, 128>}, {pipeline_mode = #tpu.pipeline_mode<synchronous>, transform_indices = @transform_3, window_bounds = array<i64: 1, 128>}, {pipeline_mode = #tpu.pipeline_mode<synchronous>, transform_indices = @transform_4, window_bounds = array<i64: 128, 128>}, {pipeline_mode = #tpu.pipeline_mode<synchronous>, transform_indices = @transform_5, window_bounds = array<i64: 1, 128>}, {pipeline_mode = #tpu.pipeline_mode<synchronous>, transform_indices = @transform_6, window_bounds = array<i64: 8, 128>}, {pipeline_mode = #tpu.pipeline_mode<synchronous>, transform_indices = @transform_7, window_bounds = array<i64: 128, 128>}, {pipeline_mode = #tpu.pipeline_mode<synchronous>, transform_indices = @transform_8, window_bounds = array<i64: 1, 128>}, {pipeline_mode = #tpu.pipeline_mode<synchronous>, transform_indices = @transform_9, window_bounds = array<i64: 1, 128>}, {transform_indices = @transform_10, window_bounds = array<i64: 1, 1>}, {pipeline_mode = #tpu.pipeline_mode<synchronous>, transform_indices = @transform_11, window_bounds = array<i64: 2, 128>}, {pipeline_mode = #tpu.pipeline_mode<synchronous>, transform_indices = @transform_12, window_bounds = array<i64: 2, 128>}]} {
    %c0_i32 = arith.constant 0 : i32
    %0 = arith.cmpi eq, %arg0, %c0_i32 : i32
    %1 = arith.extui %0 : i1 to i32
    %c0_i32_0 = arith.constant 0 : i32
    %2 = arith.cmpi ne, %1, %c0_i32_0 : i32
    scf.if %2 {
      %cst_10 = arith.constant 0.000000e+00 : f32
      %12 = vector.broadcast %cst_10 : f32 to vector<2x128xf32>
      %c0_11 = arith.constant 0 : index
      %c0_12 = arith.constant 0 : index
      %13 = vector.load %arg14[%c0_11, %c0_12] : memref<2x128xf32, #tpu.memory_space<vmem>>, vector<2x128xf32>
      tpu.vector_store %arg14[%c0_11, %c0_12], %12 {strides = array<i32>} : memref<2x128xf32, #tpu.memory_space<vmem>>, vector<2x128xf32>,
    } else {
    }
    %c0 = arith.constant 0 : index
    %c0_1 = arith.constant 0 : index
    %3 = vector.load %arg14[%c0, %c0_1] : memref<2x128xf32, #tpu.memory_space<vmem>>, vector<2x128xf32>
    %c0_2 = arith.constant 0 : index
    %c0_3 = arith.constant 0 : index
    %4 = vector.load %arg1[%c0_2, %c0_3] : memref<2x256xbf16, #tpu.memory_space<vmem>>, vector<2x256xbf16>
    %c0_4 = arith.constant 0 : index
    %c0_5 = arith.constant 0 : index
    %5 = vector.load %arg3[%c0_4, %c0_5] : memref<256x128xbf16, #tpu.memory_space<vmem>>, vector<256x128xbf16>
    %cst = arith.constant dense<0.000000e+00> : vector<2x128xf32>
    %6 = tpu.matmul %4, %5, %cst {dimension_numbers = #tpu.dot_dimension_numbers<[1], [0], [0], [1], [0, 0, 1, 1], [], []>} : vector<2x256xbf16>, vector<256x128xbf16>, vector<2x128xf32> -> vector<2x128xf32>
    %7 = arith.addf %3, %6 : vector<2x128xf32>
    %c0_6 = arith.constant 0 : index
    %c0_7 = arith.constant 0 : index
    %8 = vector.load %arg14[%c0_6, %c0_7] : memref<2x128xf32, #tpu.memory_space<vmem>>, vector<2x128xf32>
    tpu.vector_store %arg14[%c0_6, %c0_7], %7 {strides = array<i32>} : memref<2x128xf32, #tpu.memory_space<vmem>>, vector<2x128xf32>,
    %c0_i32_8 = arith.constant 0 : i32
    %9 = arith.cmpi eq, %arg0, %c0_i32_8 : i32
    %10 = arith.extui %9 : i1 to i32
    %c0_i32_9 = arith.constant 0 : i32
    %11 = arith.cmpi ne, %10, %c0_i32_9 : i32
    scf.if %11 {
      %c0_10 = arith.constant 0 : index
      %c0_11 = arith.constant 0 : index
      %12 = vector.load %arg14[%c0_10, %c0_11] : memref<2x128xf32, #tpu.memory_space<vmem>>, vector<2x128xf32>
      %c0_12 = arith.constant 0 : index
      %c0_13 = arith.constant 0 : index
      %13 = vector.load %arg4[%c0_12, %c0_13] : memref<1x128xf32, #tpu.memory_space<vmem>>, vector<1x128xf32>
      %14 = vector.broadcast %13 : vector<1x128xf32> to vector<2x128xf32>
      %15 = arith.addf %12, %14 : vector<2x128xf32>
      %cst_14 = arith.constant 0.000000e+00 : f32
      %16 = vector.broadcast %cst_14 : f32 to vector<2x128xf32>
      %17 = arith.maximumf %15, %16 : vector<2x128xf32>
      %18 = arith.truncf %17 : vector<2x128xf32> to vector<2x128xbf16>
      %c0_15 = arith.constant 0 : index
      %c0_16 = arith.constant 0 : index
      %19 = vector.load %arg5[%c0_15, %c0_16] : memref<128x128xbf16, #tpu.memory_space<vmem>>, vector<128x128xbf16>
      %cst_17 = arith.constant dense<0.000000e+00> : vector<2x128xf32>
      %20 = tpu.matmul %18, %19, %cst_17 {dimension_numbers = #tpu.dot_dimension_numbers<[1], [0], [0], [1], [0, 0, 1, 1], [], []>} : vector<2x128xbf16>, vector<128x128xbf16>, vector<2x128xf32> -> vector<2x128xf32>
      %c0_18 = arith.constant 0 : index
      %c0_19 = arith.constant 0 : index
      %21 = vector.load %arg6[%c0_18, %c0_19] : memref<1x128xf32, #tpu.memory_space<vmem>>, vector<1x128xf32>
      %22 = vector.broadcast %21 : vector<1x128xf32> to vector<2x128xf32>
      %23 = arith.addf %20, %22 : vector<2x128xf32>
      %c0_20 = arith.constant 0 : index
      %c0_21 = arith.constant 0 : index
      %24 = vector.load %arg13[%c0_20, %c0_21] : memref<2x128xf32, #tpu.memory_space<vmem>>, vector<2x128xf32>
      tpu.vector_store %arg13[%c0_20, %c0_21], %23 {strides = array<i32>} : memref<2x128xf32, #tpu.memory_space<vmem>>, vector<2x128xf32>,
      %c0_22 = arith.constant 0 : index
      %c0_23 = arith.constant 0 : index
      %25 = vector.load %arg2[%c0_22, %c0_23] : memref<256x8xbf16, #tpu.memory_space<vmem>>, vector<256x8xbf16>
      %c0_24 = arith.constant 0 : index
      %c0_25 = arith.constant 0 : index
      %26 = vector.load %arg7[%c0_24, %c0_25] : memref<8x128xbf16, #tpu.memory_space<vmem>>, vector<8x128xbf16>
      %cst_26 = arith.constant dense<0.000000e+00> : vector<256x128xf32>
      %27 = tpu.matmul %25, %26, %cst_26 {dimension_numbers = #tpu.dot_dimension_numbers<[1], [0], [0], [1], [0, 0, 1, 1], [], []>} : vector<256x8xbf16>, vector<8x128xbf16>, vector<256x128xf32> -> vector<256x128xf32>
      %28 = arith.truncf %23 : vector<2x128xf32> to vector<2x128xbf16>
      %c0_27 = arith.constant 0 : index
      %c0_28 = arith.constant 0 : index
      %29 = vector.load %arg8[%c0_27, %c0_28] : memref<128x128xbf16, #tpu.memory_space<vmem>>, vector<128x128xbf16>
      %cst_29 = arith.constant dense<0.000000e+00> : vector<2x128xf32>
      %30 = tpu.matmul %28, %29, %cst_29 {dimension_numbers = #tpu.dot_dimension_numbers<[1], [0], [0], [1], [0, 0, 1, 1], [], []>} : vector<2x128xbf16>, vector<128x128xbf16>, vector<2x128xf32> -> vector<2x128xf32>
      %c0_30 = arith.constant 0 : index
      %c0_31 = arith.constant 0 : index
      %31 = vector.load %arg9[%c0_30, %c0_31] : memref<1x128xf32, #tpu.memory_space<vmem>>, vector<1x128xf32>
      %32 = vector.broadcast %31 : vector<1x128xf32> to vector<2x128xf32>
      %33 = arith.addf %30, %32 : vector<2x128xf32>
      %34 = vector.shape_cast %27 : vector<256x128xf32> to vector<2x128x128xf32>
      %35 = vector.shape_cast %33 : vector<2x128xf32> to vector<2x1x128xf32>
      %36 = vector.broadcast %35 : vector<2x1x128xf32> to vector<2x128x128xf32>
      %37 = arith.addf %34, %36 : vector<2x128x128xf32>
      %cst_32 = arith.constant 0.000000e+00 : f32
      %38 = vector.broadcast %cst_32 : f32 to vector<2x128x128xf32>
      %39 = arith.maximumf %37, %38 : vector<2x128x128xf32>
      %c0_33 = arith.constant 0 : index
      %c0_34 = arith.constant 0 : index
      %40 = vector.load %arg10[%c0_33, %c0_34] : memref<1x128xf32, #tpu.memory_space<vmem>>, vector<1x128xf32>
      %41 = vector.shape_cast %40 : vector<1x128xf32> to vector<1x1x128xf32>
      %42 = vector.broadcast %41 : vector<1x1x128xf32> to vector<2x128x128xf32>
      %43 = arith.mulf %39, %42 : vector<2x128x128xf32>
      %cst_35 = arith.constant dense<0.000000e+00> : vector<2x128xf32>
      %44 = vector.multi_reduction <add>, %43, %cst_35 [2] : vector<2x128x128xf32> to vector<2x128xf32>
      %c0_36 = arith.constant 0 : index
      %c0_37 = arith.constant 0 : index
      %45 = memref.load %arg11[%c0_36, %c0_37] : memref<1x1xf32, #tpu.memory_space<smem>>
      %46 = vector.broadcast %45 : f32 to vector<2x128xf32>
      %47 = arith.addf %44, %46 : vector<2x128xf32>
      %c0_38 = arith.constant 0 : index
      %c0_39 = arith.constant 0 : index
      %48 = vector.load %arg12[%c0_38, %c0_39] : memref<2x128xf32, #tpu.memory_space<vmem>>, vector<2x128xf32>
      tpu.vector_store %arg12[%c0_38, %c0_39], %47 {strides = array<i32>} : memref<2x128xf32, #tpu.memory_space<vmem>>, vector<2x128xf32>,
    } else {
    }
    return
  }
  func.func @transform_0(%arg0: i32) -> (i32, i32) {
    %c0_i32 = arith.constant 0 : i32
    %c0_i32_0 = arith.constant 0 : i32
    return %c0_i32, %arg0 : i32, i32
  }
  func.func @transform_1(%arg0: i32) -> (i32, i32) {
    %c0_i32 = arith.constant 0 : i32
    %c0_i32_0 = arith.constant 0 : i32
    %c0_i32_1 = arith.constant 0 : i32
    return %c0_i32, %c0_i32_0 : i32, i32
  }
  func.func @transform_2(%arg0: i32) -> (i32, i32) {
    %c0_i32 = arith.constant 0 : i32
    %c0_i32_0 = arith.constant 0 : i32
    return %arg0, %c0_i32 : i32, i32
  }
  func.func @transform_3(%arg0: i32) -> (i32, i32) {
    %c0_i32 = arith.constant 0 : i32
    %c0_i32_0 = arith.constant 0 : i32
    %c0_i32_1 = arith.constant 0 : i32
    return %c0_i32, %c0_i32_0 : i32, i32
  }
  func.func @transform_4(%arg0: i32) -> (i32, i32) {
    %c0_i32 = arith.constant 0 : i32
    %c0_i32_0 = arith.constant 0 : i32
    %c0_i32_1 = arith.constant 0 : i32
    return %c0_i32, %c0_i32_0 : i32, i32
  }
  func.func @transform_5(%arg0: i32) -> (i32, i32) {
    %c0_i32 = arith.constant 0 : i32
    %c0_i32_0 = arith.constant 0 : i32
    %c0_i32_1 = arith.constant 0 : i32
    return %c0_i32, %c0_i32_0 : i32, i32
  }
  func.func @transform_6(%arg0: i32) -> (i32, i32) {
    %c0_i32 = arith.constant 0 : i32
    %c0_i32_0 = arith.constant 0 : i32
    %c0_i32_1 = arith.constant 0 : i32
    return %c0_i32, %c0_i32_0 : i32, i32
  }
  func.func @transform_7(%arg0: i32) -> (i32, i32) {
    %c0_i32 = arith.constant 0 : i32
    %c0_i32_0 = arith.constant 0 : i32
    %c0_i32_1 = arith.constant 0 : i32
    return %c0_i32, %c0_i32_0 : i32, i32
  }
  func.func @transform_8(%arg0: i32) -> (i32, i32) {
    %c0_i32 = arith.constant 0 : i32
    %c0_i32_0 = arith.constant 0 : i32
    %c0_i32_1 = arith.constant 0 : i32
    return %c0_i32, %c0_i32_0 : i32, i32
  }
  func.func @transform_9(%arg0: i32) -> (i32, i32) {
    %c0_i32 = arith.constant 0 : i32
    %c0_i32_0 = arith.constant 0 : i32
    %c0_i32_1 = arith.constant 0 : i32
    return %c0_i32, %c0_i32_0 : i32, i32
  }
  func.func @transform_10(%arg0: i32) -> (i32, i32) {
    %c0_i32 = arith.constant 0 : i32
    %c0_i32_0 = arith.constant 0 : i32
    %c0_i32_1 = arith.constant 0 : i32
    return %c0_i32, %c0_i32_0 : i32, i32
  }
  func.func @transform_11(%arg0: i32) -> (i32, i32) {
    %c0_i32 = arith.constant 0 : i32
    %c0_i32_0 = arith.constant 0 : i32
    %c0_i32_1 = arith.constant 0 : i32
    return %c0_i32, %c0_i32_0 : i32, i32
  }
  func.func @transform_12(%arg0: i32) -> (i32, i32) {
    %c0_i32 = arith.constant 0 : i32
    %c0_i32_0 = arith.constant 0 : i32
    %c0_i32_1 = arith.constant 0 : i32
    return %c0_i32, %c0_i32_0 : i32, i32
  }
}

</mosaic_0001>

<llo_original>
// kernel: autoencoder_forward.1
$region0: #{autoencoder_forward.1}
  #allocation0 [shape = 'u32[]', space=smem, size = 0x4, offset = 0x4, fixed_abs, tag = 'smem constant byte address 0x4 - core index']
  #allocation1 [shape = 'u32[144,128]{1,0:T(1,128)}', space=vmem, size = 0x12000, scoped, tag = 'internal scratch']
  #allocation2 [shape = 'f32[2,128]{1,0:T(2,128)}', space=vmem, size = 0x400, scoped, tag = 'scratch operand']
  #allocation3 [shape = 'f32[1,1]{1,0:T(1,128)S(6)}', space=smem, size = 0x200, scoped, tag = 'scoped memory for autoencoder_forward.1']
  %s0 = inlined_call_operand.vmem [shape: bf16[2,256], index: 0, kind: input, shape index: {}]
  %s1 = inlined_call_operand.vmem [shape: bf16[256,8], index: 1, kind: input, shape index: {}]
  %s2 = inlined_call_operand.vmem [shape: bf16[256,128], index: 2, kind: input, shape index: {}]
  %s3 = inlined_call_operand.vmem [shape: f32[1,128], index: 3, kind: input, shape index: {}]
  %s4 = inlined_call_operand.vmem [shape: bf16[128,128], index: 4, kind: input, shape index: {}]
  %s5 = inlined_call_operand.vmem [shape: f32[1,128], index: 5, kind: input, shape index: {}]
  %s6 = inlined_call_operand.vmem [shape: bf16[8,128], index: 6, kind: input, shape index: {}]
  %s7 = inlined_call_operand.vmem [shape: bf16[128,128], index: 7, kind: input, shape index: {}]
  %s8 = inlined_call_operand.vmem [shape: f32[1,128], index: 8, kind: input, shape index: {}]
  %s9 = inlined_call_operand.vmem [shape: f32[1,128], index: 9, kind: input, shape index: {}]
  %s10 = inlined_call_operand.<no memory space> [shape: f32[1,1], index: 10, kind: input, shape index: {}]
  %s11 = inlined_call_operand.hbm [shape: f32[2,128], index: 11, kind: output, shape index: {0}]
  %s12 = inlined_call_operand.hbm [shape: f32[2,128], index: 12, kind: output, shape index: {1}]
  %13 = xla_tuple %s11, %s12
  %s14 = sld [smem:[#allocation0]]
  $region70: #{autoencoder_forward.1} parent=0
    _
  %s16 = ssub.s32 1, %s14
  %s17 = scalar_select 0, %s16, %s14
  %18 = sst [smem:[#allocation3]] %s10
  $region1: #{autoencoder_forward.1} parent=0
    #allocation4 [shape = 'u8[1024]{0}', space=vmem, size = 0x400, scoped, tag = 'output window, operand 0, single buffered']
    #allocation5 [shape = 's32[1]{0}', space=sflag, size = 0x4, scoped, tag = 'scoped memory for autoencoder_forward.1']
    #allocation6 [shape = 'u8[1024]{0}', space=vmem, size = 0x400, scoped, tag = 'output window, operand 1, single buffered']
    #allocation7 [shape = 's32[1]{0}', space=sflag, size = 0x4, scoped, tag = 'scoped memory for autoencoder_forward.1']
    %19 = vsyncpa [#allocation5], 0
    %20 = vsyncpa [#allocation7], 0
    // Predicated region
    $region2: #{autoencoder_forward.1} parent=1 // pred_check
      _
    $region3: #{autoencoder_forward.1} parent=1 // pred_check_branch
      %22 = sbr.rel (0) target = $region5
    $region4: #{autoencoder_forward.1} parent=1 // pred_region
      _
    $region5: #{autoencoder_forward.1} parent=1 // pred_fallthru
      _
    // Predicated region
    $region6: #{autoencoder_forward.1} parent=1 // pred_check
      _
    $region7: #{autoencoder_forward.1} parent=1 // pred_check_branch
      %24 = sbr.rel (0) target = $region9
    $region8: #{autoencoder_forward.1} parent=1 // pred_region
      _
    $region9: #{autoencoder_forward.1} parent=1 // pred_fallthru
      _
    // Predicated region
    $region10: #{autoencoder_forward.1} parent=1 // pred_check
      _
    $region11: #{autoencoder_forward.1} parent=1 // pred_check_branch
      %26 = sbr.rel (0) target = $region13
    $region12: #{autoencoder_forward.1} parent=1 // pred_region
      _
    $region13: #{autoencoder_forward.1} parent=1 // pred_fallthru
      _
    // Predicated region
    $region14: #{autoencoder_forward.1} parent=1 // pred_check
      _
    $region15: #{autoencoder_forward.1} parent=1 // pred_check_branch
      %28 = sbr.rel (0) target = $region17
    $region16: #{autoencoder_forward.1} parent=1 // pred_region
      _
    $region17: #{autoencoder_forward.1} parent=1 // pred_fallthru
      _
    // Predicated region
    $region18: #{autoencoder_forward.1} parent=1 // pred_check
      _
    $region19: #{autoencoder_forward.1} parent=1 // pred_check_branch
      %30 = sbr.rel (0) target = $region21
    $region20: #{autoencoder_forward.1} parent=1 // pred_region
      _
    $region21: #{autoencoder_forward.1} parent=1 // pred_fallthru
      _
    // Predicated region
    $region22: #{autoencoder_forward.1} parent=1 // pred_check
      _
    $region23: #{autoencoder_forward.1} parent=1 // pred_check_branch
      %32 = sbr.rel (0) target = $region25
    $region24: #{autoencoder_forward.1} parent=1 // pred_region
      _
    $region25: #{autoencoder_forward.1} parent=1 // pred_fallthru
      _
    // Predicated region
    $region26: #{autoencoder_forward.1} parent=1 // pred_check
      _
    $region27: #{autoencoder_forward.1} parent=1 // pred_check_branch
      %34 = sbr.rel (0) target = $region29
    $region28: #{autoencoder_forward.1} parent=1 // pred_region
      _
    $region29: #{autoencoder_forward.1} parent=1 // pred_fallthru
      _
    // Predicated region
    $region30: #{autoencoder_forward.1} parent=1 // pred_check
      _
    $region31: #{autoencoder_forward.1} parent=1 // pred_check_branch
      %36 = sbr.rel (0) target = $region33
    $region32: #{autoencoder_forward.1} parent=1 // pred_region
      _
    $region33: #{autoencoder_forward.1} parent=1 // pred_fallthru
      _
    // Predicated region
    $region34: #{autoencoder_forward.1} parent=1 // pred_check
      _
    $region35: #{autoencoder_forward.1} parent=1 // pred_check_branch
      %38 = sbr.rel (0) target = $region37
    $region36: #{autoencoder_forward.1} parent=1 // pred_region
      _
    $region37: #{autoencoder_forward.1} parent=1 // pred_fallthru
      _
    // Predicated region
    $region38: #{autoencoder_forward.1} parent=1 // pred_check
      _
    $region39: #{autoencoder_forward.1} parent=1 // pred_check_branch
      %40 = sbr.rel (0) target = $region41
    $region40: #{autoencoder_forward.1} parent=1 // pred_region
      _
    $region41: #{autoencoder_forward.1} parent=1 // pred_fallthru
      _
    // Predicated region
    $region42: #{autoencoder_forward.1} parent=1 // pred_check
      _
    $region43: #{autoencoder_forward.1} parent=1 // pred_check_branch
      %42 = sbr.rel (0) target = $region45
    $region44: #{autoencoder_forward.1} parent=1 // pred_region
      _
    $region45: #{autoencoder_forward.1} parent=1 // pred_fallthru
      _
    %p44 = scmp.eq.s32.totalorder 0, 0
    // Predicated region
    $region46: #{autoencoder_forward.1} parent=1 // pred_check
      %p45 = pneg %p44
    $region47: #{autoencoder_forward.1} parent=1 // pred_check_branch
      %47 = sbr.rel (%p45) target = $region49
    $region48: #{autoencoder_forward.1} parent=1 // pred_region
      %48 = vst [vmem:[#allocation2] sm:$0x3] 0.0
    $region49: #{autoencoder_forward.1} parent=1 // pred_fallthru
      _
    %v49 = vld [vmem:[#allocation2] sm:$0x3]
    %v50 = vld [vmem:[%s0] sm:$0x3]
    %v51 = vld [vmem:[%s2] sm:$0xf]
    %v52 = vld [vmem:[%s2 + $0x4] sm:$0xf]
    %v53 = vld [vmem:[%s2 + $0x8] sm:$0xf]
    %v54 = vld [vmem:[%s2 + $0xc] sm:$0xf]
    %v55 = vld [vmem:[%s2 + $0x10] sm:$0xf]
    %v56 = vld [vmem:[%s2 + $0x14] sm:$0xf]
    %v57 = vld [vmem:[%s2 + $0x18] sm:$0xf]
    %v58 = vld [vmem:[%s2 + $0x1c] sm:$0xf]
    %v59 = vld [vmem:[%s2 + $0x20] sm:$0xf]
    %v60 = vld [vmem:[%s2 + $0x24] sm:$0xf]
    %v61 = vld [vmem:[%s2 + $0x28] sm:$0xf]
    %v62 = vld [vmem:[%s2 + $0x2c] sm:$0xf]
    %v63 = vld [vmem:[%s2 + $0x30] sm:$0xf]
    %v64 = vld [vmem:[%s2 + $0x34] sm:$0xf]
    %v65 = vld [vmem:[%s2 + $0x38] sm:$0xf]
    %v66 = vld [vmem:[%s2 + $0x3c] sm:$0xf]
    %v67 = vld [vmem:[%s2 + $0x40] sm:$0xf]
    %v68 = vld [vmem:[%s2 + $0x44] sm:$0xf]
    %v69 = vld [vmem:[%s2 + $0x48] sm:$0xf]
    %v70 = vld [vmem:[%s2 + $0x4c] sm:$0xf]
    %v71 = vld [vmem:[%s2 + $0x50] sm:$0xf]
    %v72 = vld [vmem:[%s2 + $0x54] sm:$0xf]
    %v73 = vld [vmem:[%s2 + $0x58] sm:$0xf]
    %v74 = vld [vmem:[%s2 + $0x5c] sm:$0xf]
    %v75 = vld [vmem:[%s2 + $0x60] sm:$0xf]
    %v76 = vld [vmem:[%s2 + $0x64] sm:$0xf]
    %v77 = vld [vmem:[%s2 + $0x68] sm:$0xf]
    %v78 = vld [vmem:[%s2 + $0x6c] sm:$0xf]
    %v79 = vld [vmem:[%s2 + $0x70] sm:$0xf]
    %v80 = vld [vmem:[%s2 + $0x74] sm:$0xf]
    %v81 = vld [vmem:[%s2 + $0x78] sm:$0xf]
    %v82 = vld [vmem:[%s2 + $0x7c] sm:$0xf]
    %v85 = vunpack.c.l.s4 1966171168
    %v86 = vunpack.c.0.s8 %v85
    %v87 = vlaneseq
    %v88 = vshrl.u32 %v87, 7
    %v89 = vsub.s32 %v86, %v88
    %v90 = vrot.slane %v50, %v89
    %v91 = vcombine.high %v90, %v90
    %v93 = vunpack.c.l.s4 1966171168
    %v94 = vunpack.c.0.s8 %v93
    %v95 = vlaneseq
    %v96 = vshrl.u32 %v95, 7
    %v97 = vsub.s32 %v94, %v96
    %v98 = vrot.slane %v90, %v97
    %v100 = vunpack.c.l.s4 1966171168
    %v101 = vunpack.c.0.s8 %v100
    %v102 = vlaneseq
    %v103 = vshrl.u32 %v102, 7
    %v104 = vsub.s32 %v101, %v103
    %v105 = vrot.slane %v91, %v104
    %v140 = vunpack.c.l.b16 %v51
    %v141 = vunpack.c.l.b16 %v52
    %v142 = vunpack.c.l.b16 %v53
    %v143 = vunpack.c.l.b16 %v54
    %v144 = vunpack.c.l.b16 %v55
    %v145 = vunpack.c.l.b16 %v56
    %v146 = vunpack.c.l.b16 %v57
    %v147 = vunpack.c.l.b16 %v58
    %v148 = vunpack.c.l.b16 %v59
    %v149 = vunpack.c.l.b16 %v60
    %v150 = vunpack.c.l.b16 %v61
    %v151 = vunpack.c.l.b16 %v62
    %v152 = vunpack.c.l.b16 %v63
    %v153 = vunpack.c.l.b16 %v64
    %v154 = vunpack.c.l.b16 %v65
    %v155 = vunpack.c.l.b16 %v66
    %v156 = vunpack.c.l.b16 %v67
    %v157 = vunpack.c.l.b16 %v68
    %v158 = vunpack.c.l.b16 %v69
    %v159 = vunpack.c.l.b16 %v70
    %v160 = vunpack.c.l.b16 %v71
    %v161 = vunpack.c.l.b16 %v72
    %v162 = vunpack.c.l.b16 %v73
    %v163 = vunpack.c.l.b16 %v74
    %v164 = vunpack.c.l.b16 %v75
    %v165 = vunpack.c.l.b16 %v76
    %v166 = vunpack.c.l.b16 %v77
    %v167 = vunpack.c.l.b16 %v78
    %v168 = vunpack.c.l.b16 %v79
    %v169 = vunpack.c.l.b16 %v80
    %v170 = vunpack.c.l.b16 %v81
    %v171 = vunpack.c.l.b16 %v82
    %v172 = vpack.c.b16 %v141, %v140
    %v173 = vpack.c.b16 %v143, %v142
    %v174 = vpack.c.b16 %v145, %v144
    %v175 = vpack.c.b16 %v147, %v146
    %v176 = vpack.c.b16 %v149, %v148
    %v177 = vpack.c.b16 %v151, %v150
    %v178 = vpack.c.b16 %v153, %v152
    %v179 = vpack.c.b16 %v155, %v154
    %v180 = vpack.c.b16 %v157, %v156
    %v181 = vpack.c.b16 %v159, %v158
    %v182 = vpack.c.b16 %v161, %v160
    %v183 = vpack.c.b16 %v163, %v162
    %v184 = vpack.c.b16 %v165, %v164
    %v185 = vpack.c.b16 %v167, %v166
    %v186 = vpack.c.b16 %v169, %v168
    %v187 = vpack.c.b16 %v171, %v170
    %204 = vmatprep.subr.bf16.mxu0 0
    %205 = vmatpush1.bf16.msra.mxu0 %v172
    %206 = vmatprep.subr.bf16.mxu0 0
    %207 = vmatpush1.bf16.msra.mxu0 %v173
    %208 = vmatprep.subr.bf16.mxu0 0
    %209 = vmatpush1.bf16.msra.mxu0 %v174
    %210 = vmatprep.subr.bf16.mxu0 0
    %211 = vmatpush1.bf16.msra.mxu0 %v175
    %212 = vmatprep.subr.bf16.mxu0 0
    %213 = vmatpush1.bf16.msra.mxu0 %v176
    %214 = vmatprep.subr.bf16.mxu0 0
    %215 = vmatpush1.bf16.msra.mxu0 %v177
    %216 = vmatprep.subr.bf16.mxu0 0
    %217 = vmatpush1.bf16.msra.mxu0 %v178
    %218 = vmatprep.subr.bf16.mxu0 0
    %219 = vmatpush1.bf16.msra.mxu0 %v179
    %220 = vmatprep.subr.bf16.mxu0 0
    %221 = vmatpush1.bf16.msra.mxu0 %v180
    %222 = vmatprep.subr.bf16.mxu0 0
    %223 = vmatpush1.bf16.msra.mxu0 %v181
    %224 = vmatprep.subr.bf16.mxu0 0
    %225 = vmatpush1.bf16.msra.mxu0 %v182
    %226 = vmatprep.subr.bf16.mxu0 0
    %227 = vmatpush1.bf16.msra.mxu0 %v183
    %228 = vmatprep.subr.bf16.mxu0 0
    %229 = vmatpush1.bf16.msra.mxu0 %v184
    %230 = vmatprep.subr.bf16.mxu0 0
    %231 = vmatpush1.bf16.msra.mxu0 %v185
    %232 = vmatprep.subr.bf16.mxu0 0
    %233 = vmatpush1.bf16.msra.mxu0 %v186
    %234 = vmatprep.subr.bf16.mxu0 0
    %235 = vmatpush1.bf16.msra.mxu0 %v187
    %236 = vmatprep.mubr.bf16.mxu0 %v105
    %237 = vmatmul.mubr.bf16.gmra.mrb[0].mxu0 %v98
    %v238 = vpop.f32.mrb[0].mxu0
    %v239 = vadd.f32 0.0, %v238
    %v240 = vpop.f32.mrb[0].mxu0
    %v241 = vpop.f32.mrb[0].mxu0
    %v242 = vpop.f32.mrb[0].mxu0
    %243 = vdwg.mxu0
    %v244 = vadd.f32 %v49, %v239
    %245 = vst [vmem:[#allocation2] sm:$0x3] %v244
    // Predicated region
    $region50: #{autoencoder_forward.1} parent=1 // pred_check
      %p246 = pneg %p44
    $region51: #{autoencoder_forward.1} parent=1 // pred_check_branch
      %248 = sbr.rel (%p246) target = $region53
    $region52: #{autoencoder_forward.1} parent=1 // pred_region
      %v249 = vld [vmem:[#allocation2] sm:$0x3]
      %v250 = vld [vmem:[%s3] sm:$0x1]
      %v252 = vlaneseq
      %v253 = vshrl.u32 %v252, 7
      %v254 = vsub.s32 0, %v253
      %v255 = vrot.slane %v250, %v254
      %v257 = vadd.f32 %v249, %v255
      %v258 = vmax.f32 %v257, 0.0
      %v259 = vpack.c.bf16 %v258, %v258
      %v260 = vld [vmem:[%s4] sm:$0xf]
      %v261 = vld [vmem:[%s4 + $0x4] sm:$0xf]
      %v262 = vld [vmem:[%s4 + $0x8] sm:$0xf]
      %v263 = vld [vmem:[%s4 + $0xc] sm:$0xf]
      %v264 = vld [vmem:[%s4 + $0x10] sm:$0xf]
      %v265 = vld [vmem:[%s4 + $0x14] sm:$0xf]
      %v266 = vld [vmem:[%s4 + $0x18] sm:$0xf]
      %v267 = vld [vmem:[%s4 + $0x1c] sm:$0xf]
      %v268 = vld [vmem:[%s4 + $0x20] sm:$0xf]
      %v269 = vld [vmem:[%s4 + $0x24] sm:$0xf]
      %v270 = vld [vmem:[%s4 + $0x28] sm:$0xf]
      %v271 = vld [vmem:[%s4 + $0x2c] sm:$0xf]
      %v272 = vld [vmem:[%s4 + $0x30] sm:$0xf]
      %v273 = vld [vmem:[%s4 + $0x34] sm:$0xf]
      %v274 = vld [vmem:[%s4 + $0x38] sm:$0xf]
      %v275 = vld [vmem:[%s4 + $0x3c] sm:$0xf]
      %v276 = vld [vmem:[%s5] sm:$0x1]
      %v278 = vlaneseq
      %v279 = vshrl.u32 %v278, 7
      %v280 = vsub.s32 0, %v279
      %v281 = vrot.slane %v276, %v280
      %v299 = vunpack.c.l.b16 %v260
      %v300 = vunpack.c.l.b16 %v261
      %v301 = vunpack.c.l.b16 %v262
      %v302 = vunpack.c.l.b16 %v263
      %v303 = vunpack.c.l.b16 %v264
      %v304 = vunpack.c.l.b16 %v265
      %v305 = vunpack.c.l.b16 %v266
      %v306 = vunpack.c.l.b16 %v267
      %v307 = vunpack.c.l.b16 %v268
      %v308 = vunpack.c.l.b16 %v269
      %v309 = vunpack.c.l.b16 %v270
      %v310 = vunpack.c.l.b16 %v271
      %v311 = vunpack.c.l.b16 %v272
      %v312 = vunpack.c.l.b16 %v273
      %v313 = vunpack.c.l.b16 %v274
      %v314 = vunpack.c.l.b16 %v275
      %v315 = vpack.c.b16 %v300, %v299
      %v316 = vpack.c.b16 %v302, %v301
      %v317 = vpack.c.b16 %v304, %v303
      %v318 = vpack.c.b16 %v306, %v305
      %v319 = vpack.c.b16 %v308, %v307
      %v320 = vpack.c.b16 %v310, %v309
      %v321 = vpack.c.b16 %v312, %v311
      %v322 = vpack.c.b16 %v314, %v313
      %331 = vmatprep.subr.bf16.mxu0 0
      %332 = vmatpush1.bf16.msra.mxu0 %v315
      %333 = vmatprep.subr.bf16.mxu0 0
      %334 = vmatpush1.bf16.msra.mxu0 %v316
      %335 = vmatprep.subr.bf16.mxu0 0
      %336 = vmatpush1.bf16.msra.mxu0 %v317
      %337 = vmatprep.subr.bf16.mxu0 0
      %338 = vmatpush1.bf16.msra.mxu0 %v318
      %339 = vmatprep.subr.bf16.mxu0 0
      %340 = vmatpush1.bf16.msra.mxu0 %v319
      %341 = vmatprep.subr.bf16.mxu0 0
      %342 = vmatpush1.bf16.msra.mxu0 %v320
      %343 = vmatprep.subr.bf16.mxu0 0
      %344 = vmatpush1.bf16.msra.mxu0 %v321
      %345 = vmatprep.subr.bf16.mxu0 0
      %346 = vmatpush1.bf16.msra.mxu0 %v322
      %347 = vmatprep.subr.bf16.mxu0 0
      %348 = vmatpush1.bf16.msra.mxu0 0
      %349 = vmatprep.subr.bf16.mxu0 0
      %350 = vmatpush1.bf16.msra.mxu0 0
      %351 = vmatprep.subr.bf16.mxu0 0
      %352 = vmatpush1.bf16.msra.mxu0 0
      %353 = vmatprep.subr.bf16.mxu0 0
      %354 = vmatpush1.bf16.msra.mxu0 0
      %355 = vmatprep.subr.bf16.mxu0 0
      %356 = vmatpush1.bf16.msra.mxu0 0
      %357 = vmatprep.subr.bf16.mxu0 0
      %358 = vmatpush1.bf16.msra.mxu0 0
      %359 = vmatprep.subr.bf16.mxu0 0
      %360 = vmatpush1.bf16.msra.mxu0 0
      %361 = vmatprep.subr.bf16.mxu0 0
      %362 = vmatpush1.bf16.msra.mxu0 0
      %363 = vmatprep.mubr.bf16.mxu0 0
      %364 = vmatmul.mubr.bf16.gmra.mrb[0].mxu0 %v259
      %v365 = vpop.f32.mrb[0].mxu0
      %v366 = vadd.f32 %v281, %v365
      %v367 = vpop.f32.mrb[0].mxu0
      %v368 = vpop.f32.mrb[0].mxu0
      %v369 = vpop.f32.mrb[0].mxu0
      %370 = vdwg.mxu0
      %371 = vst [vmem:[#allocation6] sm:$0x3] %v366
      %v372 = vld [vmem:[%s1] sm:$0xf]
      %v373 = vld [vmem:[%s1 + $0x4] sm:$0xf]
      %v374 = vld [vmem:[%s1 + $0x8] sm:$0xf]
      %v375 = vld [vmem:[%s1 + $0xc] sm:$0xf]
      %v376 = vld [vmem:[%s1 + $0x10] sm:$0xf]
      %v377 = vld [vmem:[%s1 + $0x14] sm:$0xf]
      %v378 = vld [vmem:[%s1 + $0x18] sm:$0xf]
      %v379 = vld [vmem:[%s1 + $0x1c] sm:$0xf]
      %v380 = vld [vmem:[%s1 + $0x20] sm:$0xf]
      %v381 = vld [vmem:[%s1 + $0x24] sm:$0xf]
      %v382 = vld [vmem:[%s1 + $0x28] sm:$0xf]
      %v383 = vld [vmem:[%s1 + $0x2c] sm:$0xf]
      %v384 = vld [vmem:[%s1 + $0x30] sm:$0xf]
      %v385 = vld [vmem:[%s1 + $0x34] sm:$0xf]
      %v386 = vld [vmem:[%s1 + $0x38] sm:$0xf]
      %v387 = vld [vmem:[%s1 + $0x3c] sm:$0xf]
      %v388 = vld [vmem:[%s1 + $0x40] sm:$0xf]
      %v389 = vld [vmem:[%s1 + $0x44] sm:$0xf]
      %v390 = vld [vmem:[%s1 + $0x48] sm:$0xf]
      %v391 = vld [vmem:[%s1 + $0x4c] sm:$0xf]
      %v392 = vld [vmem:[%s1 + $0x50] sm:$0xf]
      %v393 = vld [vmem:[%s1 + $0x54] sm:$0xf]
      %v394 = vld [vmem:[%s1 + $0x58] sm:$0xf]
      %v395 = vld [vmem:[%s1 + $0x5c] sm:$0xf]
      %v396 = vld [vmem:[%s1 + $0x60] sm:$0xf]
      %v397 = vld [vmem:[%s1 + $0x64] sm:$0xf]
      %v398 = vld [vmem:[%s1 + $0x68] sm:$0xf]
      %v399 = vld [vmem:[%s1 + $0x6c] sm:$0xf]
      %v400 = vld [vmem:[%s1 + $0x70] sm:$0xf]
      %v401 = vld [vmem:[%s1 + $0x74] sm:$0xf]
      %v402 = vld [vmem:[%s1 + $0x78] sm:$0xf]
      %v403 = vld [vmem:[%s1 + $0x7c] sm:$0xf]
      %v404 = vld [vmem:[%s6] sm:$0xf]
      %v437 = vunpack.c.l.b16 %v372
      %v438 = vunpack.c.l.b16 %v373
      %v439 = vunpack.c.l.b16 %v374
      %v440 = vunpack.c.l.b16 %v375
      %v441 = vunpack.c.l.b16 %v376
      %v442 = vunpack.c.l.b16 %v377
      %v443 = vunpack.c.l.b16 %v378
      %v444 = vunpack.c.l.b16 %v379
      %v445 = vunpack.c.l.b16 %v380
      %v446 = vunpack.c.l.b16 %v381
      %v447 = vunpack.c.l.b16 %v382
      %v448 = vunpack.c.l.b16 %v383
      %v449 = vunpack.c.l.b16 %v384
      %v450 = vunpack.c.l.b16 %v385
      %v451 = vunpack.c.l.b16 %v386
      %v452 = vunpack.c.l.b16 %v387
      %v453 = vunpack.c.l.b16 %v388
      %v454 = vunpack.c.l.b16 %v389
      %v455 = vunpack.c.l.b16 %v390
      %v456 = vunpack.c.l.b16 %v391
      %v457 = vunpack.c.l.b16 %v392
      %v458 = vunpack.c.l.b16 %v393
      %v459 = vunpack.c.l.b16 %v394
      %v460 = vunpack.c.l.b16 %v395
      %v461 = vunpack.c.l.b16 %v396
      %v462 = vunpack.c.l.b16 %v397
      %v463 = vunpack.c.l.b16 %v398
      %v464 = vunpack.c.l.b16 %v399
      %v465 = vunpack.c.l.b16 %v400
      %v466 = vunpack.c.l.b16 %v401
      %v467 = vunpack.c.l.b16 %v402
      %v468 = vunpack.c.l.b16 %v403
      %v469 = vpack.c.b16 %v438, %v437
      %v470 = vpack.c.b16 %v440, %v439
      %v471 = vpack.c.b16 %v442, %v441
      %v472 = vpack.c.b16 %v444, %v443
      %v473 = vpack.c.b16 %v446, %v445
      %v474 = vpack.c.b16 %v448, %v447
      %v475 = vpack.c.b16 %v450, %v449
      %v476 = vpack.c.b16 %v452, %v451
      %v477 = vpack.c.b16 %v454, %v453
      %v478 = vpack.c.b16 %v456, %v455
      %v479 = vpack.c.b16 %v458, %v457
      %v480 = vpack.c.b16 %v460, %v459
      %v481 = vpack.c.b16 %v462, %v461
      %v482 = vpack.c.b16 %v464, %v463
      %v483 = vpack.c.b16 %v466, %v465
      %v484 = vpack.c.b16 %v468, %v467
      %vm485 = vcmask 64512
      %v487 = vsel %vm485, %v469, 0
      %v490 = vsel %vm485, %v470, 0
      %v493 = vsel %vm485, %v471, 0
      %v496 = vsel %vm485, %v472, 0
      %v499 = vsel %vm485, %v473, 0
      %v502 = vsel %vm485, %v474, 0
      %v505 = vsel %vm485, %v475, 0
      %v508 = vsel %vm485, %v476, 0
      %v511 = vsel %vm485, %v477, 0
      %v514 = vsel %vm485, %v478, 0
      %v517 = vsel %vm485, %v479, 0
      %v520 = vsel %vm485, %v480, 0
      %v523 = vsel %vm485, %v481, 0
      %v526 = vsel %vm485, %v482, 0
      %v529 = vsel %vm485, %v483, 0
      %v532 = vsel %vm485, %v484, 0
      %vm534 = vcmask 1043456
      %v536 = vsel %vm534, %v404, 0
      %538 = vmatprep.subr.bf16.mxu0 0
      %539 = vmatpush1.bf16.msra.mxu0 %v536
      %540 = vmatprep.subr.bf16.mxu0 0
      %541 = vmatpush1.bf16.msra.mxu0 0
      %542 = vmatprep.subr.bf16.mxu0 0
      %543 = vmatpush1.bf16.msra.mxu0 0
      %544 = vmatprep.subr.bf16.mxu0 0
      %545 = vmatpush1.bf16.msra.mxu0 0
      %546 = vmatprep.subr.bf16.mxu0 0
      %547 = vmatpush1.bf16.msra.mxu0 0
      %548 = vmatprep.subr.bf16.mxu0 0
      %549 = vmatpush1.bf16.msra.mxu0 0
      %550 = vmatprep.subr.bf16.mxu0 0
      %551 = vmatpush1.bf16.msra.mxu0 0
      %552 = vmatprep.subr.bf16.mxu0 0
      %553 = vmatpush1.bf16.msra.mxu0 0
      %554 = vmatprep.subr.bf16.mxu0 0
      %555 = vmatpush1.bf16.msra.mxu0 0
      %556 = vmatprep.subr.bf16.mxu0 0
      %557 = vmatpush1.bf16.msra.mxu0 0
      %558 = vmatprep.subr.bf16.mxu0 0
      %559 = vmatpush1.bf16.msra.mxu0 0
      %560 = vmatprep.subr.bf16.mxu0 0
      %561 = vmatpush1.bf16.msra.mxu0 0
      %562 = vmatprep.subr.bf16.mxu0 0
      %563 = vmatpush1.bf16.msra.mxu0 0
      %564 = vmatprep.subr.bf16.mxu0 0
      %565 = vmatpush1.bf16.msra.mxu0 0
      %566 = vmatprep.subr.bf16.mxu0 0
      %567 = vmatpush1.bf16.msra.mxu0 0
      %568 = vmatprep.subr.bf16.mxu0 0
      %569 = vmatpush1.bf16.msra.mxu0 0
      %570 = vmatprep.mubr.bf16.mxu0 0
      %571 = vmatmul.mubr.bf16.gmra.mrb[0].mxu0 %v487
      %v572 = vpop.f32.mrb[0].mxu0
      %v573 = vadd.f32 0.0, %v572
      %v574 = vpop.f32.mrb[0].mxu0
      %v575 = vpop.f32.mrb[0].mxu0
      %v576 = vadd.f32 0.0, %v575
      %v577 = vpop.f32.mrb[0].mxu0
      %578 = vmatprep.mubr.bf16.mxu0 0
      %579 = vmatmul.mubr.bf16.gmra.mrb[0].mxu0 %v490
      %v580 = vpop.f32.mrb[0].mxu0
      %v581 = vadd.f32 0.0, %v580
      %v582 = vpop.f32.mrb[0].mxu0
      %v583 = vpop.f32.mrb[0].mxu0
      %v584 = vadd.f32 0.0, %v583
      %v585 = vpop.f32.mrb[0].mxu0
      %586 = vmatprep.mubr.bf16.mxu0 0
      %587 = vmatmul.mubr.bf16.gmra.mrb[0].mxu0 %v493
      %v588 = vpop.f32.mrb[0].mxu0
      %v589 = vadd.f32 0.0, %v588
      %v590 = vpop.f32.mrb[0].mxu0
      %v591 = vpop.f32.mrb[0].mxu0
      %v592 = vadd.f32 0.0, %v591
      %v593 = vpop.f32.mrb[0].mxu0
      %594 = vmatprep.mubr.bf16.mxu0 0
      %595 = vmatmul.mubr.bf16.gmra.mrb[0].mxu0 %v496
      %v596 = vpop.f32.mrb[0].mxu0
      %v597 = vadd.f32 0.0, %v596
      %v598 = vpop.f32.mrb[0].mxu0
      %v599 = vpop.f32.mrb[0].mxu0
      %v600 = vadd.f32 0.0, %v599
      %v601 = vpop.f32.mrb[0].mxu0
      %602 = vmatprep.mubr.bf16.mxu0 0
      %603 = vmatmul.mubr.bf16.gmra.mrb[0].mxu0 %v499
      %v604 = vpop.f32.mrb[0].mxu0
      %v605 = vadd.f32 0.0, %v604
      %v606 = vpop.f32.mrb[0].mxu0
      %v607 = vpop.f32.mrb[0].mxu0
      %v608 = vadd.f32 0.0, %v607
      %v609 = vpop.f32.mrb[0].mxu0
      %610 = vmatprep.mubr.bf16.mxu0 0
      %611 = vmatmul.mubr.bf16.gmra.mrb[0].mxu0 %v502
      %v612 = vpop.f32.mrb[0].mxu0
      %v613 = vadd.f32 0.0, %v612
      %v614 = vpop.f32.mrb[0].mxu0
      %v615 = vpop.f32.mrb[0].mxu0
      %v616 = vadd.f32 0.0, %v615
      %v617 = vpop.f32.mrb[0].mxu0
      %618 = vmatprep.mubr.bf16.mxu0 0
      %619 = vmatmul.mubr.bf16.gmra.mrb[0].mxu0 %v505
      %v620 = vpop.f32.mrb[0].mxu0
      %v621 = vadd.f32 0.0, %v620
      %v622 = vpop.f32.mrb[0].mxu0
      %v623 = vpop.f32.mrb[0].mxu0
      %v624 = vadd.f32 0.0, %v623
      %v625 = vpop.f32.mrb[0].mxu0
      %626 = vmatprep.mubr.bf16.mxu0 0
      %627 = vmatmul.mubr.bf16.gmra.mrb[0].mxu0 %v508
      %v628 = vpop.f32.mrb[0].mxu0
      %v629 = vadd.f32 0.0, %v628
      %v630 = vpop.f32.mrb[0].mxu0
      %v631 = vpop.f32.mrb[0].mxu0
      %v632 = vadd.f32 0.0, %v631
      %v633 = vpop.f32.mrb[0].mxu0
      %634 = vmatprep.mubr.bf16.mxu0 0
      %635 = vmatmul.mubr.bf16.gmra.mrb[0].mxu0 %v511
      %v636 = vpop.f32.mrb[0].mxu0
      %v637 = vadd.f32 0.0, %v636
      %v638 = vpop.f32.mrb[0].mxu0
      %v639 = vpop.f32.mrb[0].mxu0
      %v640 = vadd.f32 0.0, %v639
      %v641 = vpop.f32.mrb[0].mxu0
      %642 = vmatprep.mubr.bf16.mxu0 0
      %643 = vmatmul.mubr.bf16.gmra.mrb[0].mxu0 %v514
      %v644 = vpop.f32.mrb[0].mxu0
      %v645 = vadd.f32 0.0, %v644
      %v646 = vpop.f32.mrb[0].mxu0
      %v647 = vpop.f32.mrb[0].mxu0
      %v648 = vadd.f32 0.0, %v647
      %v649 = vpop.f32.mrb[0].mxu0
      %650 = vmatprep.mubr.bf16.mxu0 0
      %651 = vmatmul.mubr.bf16.gmra.mrb[0].mxu0 %v517
      %v652 = vpop.f32.mrb[0].mxu0
      %v653 = vadd.f32 0.0, %v652
      %v654 = vpop.f32.mrb[0].mxu0
      %v655 = vpop.f32.mrb[0].mxu0
      %v656 = vadd.f32 0.0, %v655
      %v657 = vpop.f32.mrb[0].mxu0
      %658 = vmatprep.mubr.bf16.mxu0 0
      %659 = vmatmul.mubr.bf16.gmra.mrb[0].mxu0 %v520
      %v660 = vpop.f32.mrb[0].mxu0
      %v661 = vadd.f32 0.0, %v660
      %v662 = vpop.f32.mrb[0].mxu0
      %v663 = vpop.f32.mrb[0].mxu0
      %v664 = vadd.f32 0.0, %v663
      %v665 = vpop.f32.mrb[0].mxu0
      %666 = vmatprep.mubr.bf16.mxu0 0
      %667 = vmatmul.mubr.bf16.gmra.mrb[0].mxu0 %v523
      %v668 = vpop.f32.mrb[0].mxu0
      %v669 = vadd.f32 0.0, %v668
      %v670 = vpop.f32.mrb[0].mxu0
      %v671 = vpop.f32.mrb[0].mxu0
      %v672 = vadd.f32 0.0, %v671
      %v673 = vpop.f32.mrb[0].mxu0
      %674 = vmatprep.mubr.bf16.mxu0 0
      %675 = vmatmul.mubr.bf16.gmra.mrb[0].mxu0 %v526
      %v676 = vpop.f32.mrb[0].mxu0
      %v677 = vadd.f32 0.0, %v676
      %v678 = vpop.f32.mrb[0].mxu0
      %v679 = vpop.f32.mrb[0].mxu0
      %v680 = vadd.f32 0.0, %v679
      %v681 = vpop.f32.mrb[0].mxu0
      %682 = vmatprep.mubr.bf16.mxu0 0
      %683 = vmatmul.mubr.bf16.gmra.mrb[0].mxu0 %v529
      %v684 = vpop.f32.mrb[0].mxu0
      %v685 = vadd.f32 0.0, %v684
      %v686 = vpop.f32.mrb[0].mxu0
      %v687 = vpop.f32.mrb[0].mxu0
      %v688 = vadd.f32 0.0, %v687
      %v689 = vpop.f32.mrb[0].mxu0
      %690 = vmatprep.mubr.bf16.mxu0 0
      %691 = vmatmul.mubr.bf16.gmra.mrb[0].mxu0 %v532
      %v692 = vpop.f32.mrb[0].mxu0
      %v693 = vadd.f32 0.0, %v692
      %v694 = vpop.f32.mrb[0].mxu0
      %v695 = vpop.f32.mrb[0].mxu0
      %v696 = vadd.f32 0.0, %v695
      %v697 = vpop.f32.mrb[0].mxu0
      %698 = vdwg.mxu0
      %v699 = vpack.c.bf16 %v366, %v366
      %v700 = vld [vmem:[%s7] sm:$0xf]
      %v701 = vld [vmem:[%s7 + $0x4] sm:$0xf]
      %v702 = vld [vmem:[%s7 + $0x8] sm:$0xf]
      %v703 = vld [vmem:[%s7 + $0xc] sm:$0xf]
      %v704 = vld [vmem:[%s7 + $0x10] sm:$0xf]
      %v705 = vld [vmem:[%s7 + $0x14] sm:$0xf]
      %v706 = vld [vmem:[%s7 + $0x18] sm:$0xf]
      %v707 = vld [vmem:[%s7 + $0x1c] sm:$0xf]
      %v708 = vld [vmem:[%s7 + $0x20] sm:$0xf]
      %v709 = vld [vmem:[%s7 + $0x24] sm:$0xf]
      %v710 = vld [vmem:[%s7 + $0x28] sm:$0xf]
      %v711 = vld [vmem:[%s7 + $0x2c] sm:$0xf]
      %v712 = vld [vmem:[%s7 + $0x30] sm:$0xf]
      %v713 = vld [vmem:[%s7 + $0x34] sm:$0xf]
      %v714 = vld [vmem:[%s7 + $0x38] sm:$0xf]
      %v715 = vld [vmem:[%s7 + $0x3c] sm:$0xf]
      %v716 = vld [vmem:[%s8] sm:$0x1]
      %v718 = vlaneseq
      %v719 = vshrl.u32 %v718, 7
      %v720 = vsub.s32 0, %v719
      %v721 = vrot.slane %v716, %v720
      %v739 = vunpack.c.l.b16 %v700
      %v740 = vunpack.c.l.b16 %v701
      %v741 = vunpack.c.l.b16 %v702
      %v742 = vunpack.c.l.b16 %v703
      %v743 = vunpack.c.l.b16 %v704
      %v744 = vunpack.c.l.b16 %v705
      %v745 = vunpack.c.l.b16 %v706
      %v746 = vunpack.c.l.b16 %v707
      %v747 = vunpack.c.l.b16 %v708
      %v748 = vunpack.c.l.b16 %v709
      %v749 = vunpack.c.l.b16 %v710
      %v750 = vunpack.c.l.b16 %v711
      %v751 = vunpack.c.l.b16 %v712
      %v752 = vunpack.c.l.b16 %v713
      %v753 = vunpack.c.l.b16 %v714
      %v754 = vunpack.c.l.b16 %v715
      %v755 = vpack.c.b16 %v740, %v739
      %v756 = vpack.c.b16 %v742, %v741
      %v757 = vpack.c.b16 %v744, %v743
      %v758 = vpack.c.b16 %v746, %v745
      %v759 = vpack.c.b16 %v748, %v747
      %v760 = vpack.c.b16 %v750, %v749
      %v761 = vpack.c.b16 %v752, %v751
      %v762 = vpack.c.b16 %v754, %v753
      %771 = vmatprep.subr.bf16.mxu0 0
      %772 = vmatpush1.bf16.msra.mxu0 %v755
      %773 = vmatprep.subr.bf16.mxu0 0
      %774 = vmatpush1.bf16.msra.mxu0 %v756
      %775 = vmatprep.subr.bf16.mxu0 0
      %776 = vmatpush1.bf16.msra.mxu0 %v757
      %777 = vmatprep.subr.bf16.mxu0 0
      %778 = vmatpush1.bf16.msra.mxu0 %v758
      %779 = vmatprep.subr.bf16.mxu0 0
      %780 = vmatpush1.bf16.msra.mxu0 %v759
      %781 = vmatprep.subr.bf16.mxu0 0
      %782 = vmatpush1.bf16.msra.mxu0 %v760
      %783 = vmatprep.subr.bf16.mxu0 0
      %784 = vmatpush1.bf16.msra.mxu0 %v761
      %785 = vmatprep.subr.bf16.mxu0 0
      %786 = vmatpush1.bf16.msra.mxu0 %v762
      %787 = vmatprep.subr.bf16.mxu0 0
      %788 = vmatpush1.bf16.msra.mxu0 0
      %789 = vmatprep.subr.bf16.mxu0 0
      %790 = vmatpush1.bf16.msra.mxu0 0
      %791 = vmatprep.subr.bf16.mxu0 0
      %792 = vmatpush1.bf16.msra.mxu0 0
      %793 = vmatprep.subr.bf16.mxu0 0
      %794 = vmatpush1.bf16.msra.mxu0 0
      %795 = vmatprep.subr.bf16.mxu0 0
      %796 = vmatpush1.bf16.msra.mxu0 0
      %797 = vmatprep.subr.bf16.mxu0 0
      %798 = vmatpush1.bf16.msra.mxu0 0
      %799 = vmatprep.subr.bf16.mxu0 0
      %800 = vmatpush1.bf16.msra.mxu0 0
      %801 = vmatprep.subr.bf16.mxu0 0
      %802 = vmatpush1.bf16.msra.mxu0 0
      %803 = vmatprep.mubr.bf16.mxu0 0
      %804 = vmatmul.mubr.bf16.gmra.mrb[0].mxu0 %v699
      %v805 = vpop.f32.mrb[0].mxu0
      %v806 = vadd.f32 %v721, %v805
      %v807 = vpop.f32.mrb[0].mxu0
      %v808 = vpop.f32.mrb[0].mxu0
      %v809 = vpop.f32.mrb[0].mxu0
      %810 = vdwg.mxu0
      %v813 = vunpack.c.l.s4 1966171168
      %v814 = vunpack.c.0.s8 %v813
      %v815 = vlaneseq
      %v816 = vshrl.u32 %v815, 7
      %v817 = vsub.s32 %v814, %v816
      %v818 = vrot.slane %v806, %v817
      %v819 = vcombine.high %v818, %v818
      %v821 = vunpack.c.l.s4 1966171168
      %v822 = vunpack.c.0.s8 %v821
      %v823 = vlaneseq
      %v824 = vshrl.u32 %v823, 7
      %v825 = vsub.s32 %v822, %v824
      %v826 = vrot.slane %v818, %v825
      %v828 = vunpack.c.l.s4 1966171168
      %v829 = vunpack.c.0.s8 %v828
      %v830 = vlaneseq
      %v831 = vshrl.u32 %v830, 7
      %v832 = vsub.s32 %v829, %v831
      %v833 = vrot.slane %v819, %v832
      %v834 = vlaneseq
      %v835 = vshrl.u32 %v834, 7
      %v836 = vsub.s32 0, %v835
      %v837 = vrot.slane %v826, %v836
      %v838 = vlaneseq
      %v839 = vshrl.u32 %v838, 7
      %v840 = vsub.s32 0, %v839
      %v841 = vrot.slane %v833, %v840
      %v844 = vadd.f32 %v573, %v837
      %v845 = vadd.f32 %v576, %v837
      %v846 = vadd.f32 %v581, %v837
      %v847 = vadd.f32 %v584, %v837
      %v848 = vadd.f32 %v589, %v837
      %v849 = vadd.f32 %v592, %v837
      %v850 = vadd.f32 %v597, %v837
      %v851 = vadd.f32 %v600, %v837
      %v852 = vadd.f32 %v605, %v837
      %v853 = vadd.f32 %v608, %v837
      %v854 = vadd.f32 %v613, %v837
      %v855 = vadd.f32 %v616, %v837
      %v856 = vadd.f32 %v621, %v837
      %v857 = vadd.f32 %v624, %v837
      %v858 = vadd.f32 %v629, %v837
      %v859 = vadd.f32 %v632, %v837
      %v860 = vadd.f32 %v637, %v841
      %v861 = vadd.f32 %v640, %v841
      %v862 = vadd.f32 %v645, %v841
      %v863 = vadd.f32 %v648, %v841
      %v864 = vadd.f32 %v653, %v841
      %v865 = vadd.f32 %v656, %v841
      %v866 = vadd.f32 %v661, %v841
      %v867 = vadd.f32 %v664, %v841
      %v868 = vadd.f32 %v669, %v841
      %v869 = vadd.f32 %v672, %v841
      %v870 = vadd.f32 %v677, %v841
      %v871 = vadd.f32 %v680, %v841
      %v872 = vadd.f32 %v685, %v841
      %v873 = vadd.f32 %v688, %v841
      %v874 = vadd.f32 %v693, %v841
      %v875 = vadd.f32 %v696, %v841
      %v876 = vmax.f32 %v844, 0.0
      %v877 = vmax.f32 %v845, 0.0
      %v878 = vmax.f32 %v846, 0.0
      %v879 = vmax.f32 %v847, 0.0
      %v880 = vmax.f32 %v848, 0.0
      %v881 = vmax.f32 %v849, 0.0
      %v882 = vmax.f32 %v850, 0.0
      %v883 = vmax.f32 %v851, 0.0
      %v884 = vmax.f32 %v852, 0.0
      %v885 = vmax.f32 %v853, 0.0
      %v886 = vmax.f32 %v854, 0.0
      %v887 = vmax.f32 %v855, 0.0
      %v888 = vmax.f32 %v856, 0.0
      %v889 = vmax.f32 %v857, 0.0
      %v890 = vmax.f32 %v858, 0.0
      %v891 = vmax.f32 %v859, 0.0
      %v892 = vmax.f32 %v860, 0.0
      %v893 = vmax.f32 %v861, 0.0
      %v894 = vmax.f32 %v862, 0.0
      %v895 = vmax.f32 %v863, 0.0
      %v896 = vmax.f32 %v864, 0.0
      %v897 = vmax.f32 %v865, 0.0
      %v898 = vmax.f32 %v866, 0.0
      %v899 = vmax.f32 %v867, 0.0
      %v900 = vmax.f32 %v868, 0.0
      %v901 = vmax.f32 %v869, 0.0
      %v902 = vmax.f32 %v870, 0.0
      %v903 = vmax.f32 %v871, 0.0
      %v904 = vmax.f32 %v872, 0.0
      %v905 = vmax.f32 %v873, 0.0
      %v906 = vmax.f32 %v874, 0.0
      %v907 = vmax.f32 %v875, 0.0
      %v908 = vld [vmem:[%s9] sm:$0x1]
      %v910 = vlaneseq
      %v911 = vshrl.u32 %v910, 7
      %v912 = vsub.s32 0, %v911
      %v913 = vrot.slane %v908, %v912
      %v915 = vmul.f32 %v876, %v913
      %v916 = vmul.f32 %v877, %v913
      %v917 = vmul.f32 %v878, %v913
      %v918 = vmul.f32 %v879, %v913
      %v919 = vmul.f32 %v880, %v913
      %v920 = vmul.f32 %v881, %v913
      %v921 = vmul.f32 %v882, %v913
      %v922 = vmul.f32 %v883, %v913
      %v923 = vmul.f32 %v884, %v913
      %v924 = vmul.f32 %v885, %v913
      %v925 = vmul.f32 %v886, %v913
      %v926 = vmul.f32 %v887, %v913
      %v927 = vmul.f32 %v888, %v913
      %v928 = vmul.f32 %v889, %v913
      %v929 = vmul.f32 %v890, %v913
      %v930 = vmul.f32 %v891, %v913
      %v931 = vmul.f32 %v892, %v913
      %v932 = vmul.f32 %v893, %v913
      %v933 = vmul.f32 %v894, %v913
      %v934 = vmul.f32 %v895, %v913
      %v935 = vmul.f32 %v896, %v913
      %v936 = vmul.f32 %v897, %v913
      %v937 = vmul.f32 %v898, %v913
      %v938 = vmul.f32 %v899, %v913
      %v939 = vmul.f32 %v900, %v913
      %v940 = vmul.f32 %v901, %v913
      %v941 = vmul.f32 %v902, %v913
      %v942 = vmul.f32 %v903, %v913
      %v943 = vmul.f32 %v904, %v913
      %v944 = vmul.f32 %v905, %v913
      %v945 = vmul.f32 %v906, %v913
      %v946 = vmul.f32 %v907, %v913
      %947 = vadd.xlane.f32.xlu0 %v915
      %v948 = vpop.xlane.xlu0 %947
      %949 = vadd.xlane.f32.xlu0 %v916
      %v950 = vpop.xlane.xlu0 %949
      %951 = vadd.xlane.f32.xlu0 %v917
      %v952 = vpop.xlane.xlu0 %951
      %953 = vadd.xlane.f32.xlu0 %v918
      %v954 = vpop.xlane.xlu0 %953
      %955 = vadd.xlane.f32.xlu0 %v919
      %v956 = vpop.xlane.xlu0 %955
      %957 = vadd.xlane.f32.xlu0 %v920
      %v958 = vpop.xlane.xlu0 %957
      %959 = vadd.xlane.f32.xlu0 %v921
      %v960 = vpop.xlane.xlu0 %959
      %961 = vadd.xlane.f32.xlu0 %v922
      %v962 = vpop.xlane.xlu0 %961
      %963 = vadd.xlane.f32.xlu0 %v923
      %v964 = vpop.xlane.xlu0 %963
      %965 = vadd.xlane.f32.xlu0 %v924
      %v966 = vpop.xlane.xlu0 %965
      %967 = vadd.xlane.f32.xlu0 %v925
      %v968 = vpop.xlane.xlu0 %967
      %969 = vadd.xlane.f32.xlu0 %v926
      %v970 = vpop.xlane.xlu0 %969
      %971 = vadd.xlane.f32.xlu0 %v927
      %v972 = vpop.xlane.xlu0 %971
      %973 = vadd.xlane.f32.xlu0 %v928
      %v974 = vpop.xlane.xlu0 %973
      %975 = vadd.xlane.f32.xlu0 %v929
      %v976 = vpop.xlane.xlu0 %975
      %977 = vadd.xlane.f32.xlu0 %v930
      %v978 = vpop.xlane.xlu0 %977
      %979 = vadd.xlane.f32.xlu0 %v931
      %v980 = vpop.xlane.xlu0 %979
      %981 = vadd.xlane.f32.xlu0 %v932
      %v982 = vpop.xlane.xlu0 %981
      %983 = vadd.xlane.f32.xlu0 %v933
      %v984 = vpop.xlane.xlu0 %983
      %985 = vadd.xlane.f32.xlu0 %v934
      %v986 = vpop.xlane.xlu0 %985
      %987 = vadd.xlane.f32.xlu0 %v935
      %v988 = vpop.xlane.xlu0 %987
      %989 = vadd.xlane.f32.xlu0 %v936
      %v990 = vpop.xlane.xlu0 %989
      %991 = vadd.xlane.f32.xlu0 %v937
      %v992 = vpop.xlane.xlu0 %991
      %993 = vadd.xlane.f32.xlu0 %v938
      %v994 = vpop.xlane.xlu0 %993
      %995 = vadd.xlane.f32.xlu0 %v939
      %v996 = vpop.xlane.xlu0 %995
      %997 = vadd.xlane.f32.xlu0 %v940
      %v998 = vpop.xlane.xlu0 %997
      %999 = vadd.xlane.f32.xlu0 %v941
      %v1000 = vpop.xlane.xlu0 %999
      %1001 = vadd.xlane.f32.xlu0 %v942
      %v1002 = vpop.xlane.xlu0 %1001
      %1003 = vadd.xlane.f32.xlu0 %v943
      %v1004 = vpop.xlane.xlu0 %1003
      %1005 = vadd.xlane.f32.xlu0 %v944
      %v1006 = vpop.xlane.xlu0 %1005
      %1007 = vadd.xlane.f32.xlu0 %v945
      %v1008 = vpop.xlane.xlu0 %1007
      %1009 = vadd.xlane.f32.xlu0 %v946
      %v1010 = vpop.xlane.xlu0 %1009
      %s1011 = sld [smem:[#allocation3]]
      %v1012 = vstv %s1011
      %v1013 = vadd.f32 %v948, %v1012
      %v1014 = vadd.f32 %v950, %v1012
      %v1015 = vadd.f32 %v952, %v1012
      %v1016 = vadd.f32 %v954, %v1012
      %v1017 = vadd.f32 %v956, %v1012
      %v1018 = vadd.f32 %v958, %v1012
      %v1019 = vadd.f32 %v960, %v1012
      %v1020 = vadd.f32 %v962, %v1012
      %v1021 = vadd.f32 %v964, %v1012
      %v1022 = vadd.f32 %v966, %v1012
      %v1023 = vadd.f32 %v968, %v1012
      %v1024 = vadd.f32 %v970, %v1012
      %v1025 = vadd.f32 %v972, %v1012
      %v1026 = vadd.f32 %v974, %v1012
      %v1027 = vadd.f32 %v976, %v1012
      %v1028 = vadd.f32 %v978, %v1012
      %v1029 = vadd.f32 %v980, %v1012
      %v1030 = vadd.f32 %v982, %v1012
      %v1031 = vadd.f32 %v984, %v1012
      %v1032 = vadd.f32 %v986, %v1012
      %v1033 = vadd.f32 %v988, %v1012
      %v1034 = vadd.f32 %v990, %v1012
      %v1035 = vadd.f32 %v992, %v1012
      %v1036 = vadd.f32 %v994, %v1012
      %v1037 = vadd.f32 %v996, %v1012
      %v1038 = vadd.f32 %v998, %v1012
      %v1039 = vadd.f32 %v1000, %v1012
      %v1040 = vadd.f32 %v1002, %v1012
      %v1041 = vadd.f32 %v1004, %v1012
      %v1042 = vadd.f32 %v1006, %v1012
      %v1043 = vadd.f32 %v1008, %v1012
      %v1044 = vadd.f32 %v1010, %v1012
      %v1077 = vlaneseq
      %v1078 = vand.u32 %v1077, 127
      %v1079 = vlaneseq
      %v1080 = vshrl.u32 %v1079, 7
      %v1081 = vsub.s32 %v1078, %v1080
      %v1082 = vrot.slane %v1013, %v1081
      %v1083 = vadd.s32 %v1078, 4294967288
      %v1084 = vlaneseq
      %v1085 = vshrl.u32 %v1084, 7
      %v1086 = vsub.s32 %v1083, %v1085
      %v1087 = vrot.slane %v1014, %v1086
      %vm1088 = vcmask 130112
      %v1089 = vsel %vm1088, %v1087, %v1082
      %v1090 = vadd.s32 %v1078, 4294967280
      %v1091 = vlaneseq
      %v1092 = vshrl.u32 %v1091, 7
      %v1093 = vsub.s32 %v1090, %v1092
      %v1094 = vrot.slane %v1015, %v1093
      %vm1095 = vcmask 195712
      %v1096 = vsel %vm1095, %v1094, %v1089
      %v1097 = vadd.s32 %v1078, 4294967272
      %v1098 = vlaneseq
      %v1099 = vshrl.u32 %v1098, 7
      %v1100 = vsub.s32 %v1097, %v1099
      %v1101 = vrot.slane %v1016, %v1100
      %vm1102 = vcmask 261312
      %v1103 = vsel %vm1102, %v1101, %v1096
      %v1104 = vadd.s32 %v1078, 4294967264
      %v1105 = vlaneseq
      %v1106 = vshrl.u32 %v1105, 7
      %v1107 = vsub.s32 %v1104, %v1106
      %v1108 = vrot.slane %v1017, %v1107
      %vm1109 = vcmask 326912
      %v1110 = vsel %vm1109, %v1108, %v1103
      %v1111 = vadd.s32 %v1078, 4294967256
      %v1112 = vlaneseq
      %v1113 = vshrl.u32 %v1112, 7
      %v1114 = vsub.s32 %v1111, %v1113
      %v1115 = vrot.slane %v1018, %v1114
      %vm1116 = vcmask 392512
      %v1117 = vsel %vm1116, %v1115, %v1110
      %v1118 = vadd.s32 %v1078, 4294967248
      %v1119 = vlaneseq
      %v1120 = vshrl.u32 %v1119, 7
      %v1121 = vsub.s32 %v1118, %v1120
      %v1122 = vrot.slane %v1019, %v1121
      %vm1123 = vcmask 458112
      %v1124 = vsel %vm1123, %v1122, %v1117
      %v1125 = vadd.s32 %v1078, 4294967240
      %v1126 = vlaneseq
      %v1127 = vshrl.u32 %v1126, 7
      %v1128 = vsub.s32 %v1125, %v1127
      %v1129 = vrot.slane %v1020, %v1128
      %vm1130 = vcmask 523712
      %v1131 = vsel %vm1130, %v1129, %v1124
      %v1132 = vadd.s32 %v1078, 4294967232
      %v1133 = vlaneseq
      %v1134 = vshrl.u32 %v1133, 7
      %v1135 = vsub.s32 %v1132, %v1134
      %v1136 = vrot.slane %v1021, %v1135
      %vm1137 = vcmask 589312
      %v1138 = vsel %vm1137, %v1136, %v1131
      %v1139 = vadd.s32 %v1078, 4294967224
      %v1140 = vlaneseq
      %v1141 = vshrl.u32 %v1140, 7
      %v1142 = vsub.s32 %v1139, %v1141
      %v1143 = vrot.slane %v1022, %v1142
      %vm1144 = vcmask 654912
      %v1145 = vsel %vm1144, %v1143, %v1138
      %v1146 = vadd.s32 %v1078, 4294967216
      %v1147 = vlaneseq
      %v1148 = vshrl.u32 %v1147, 7
      %v1149 = vsub.s32 %v1146, %v1148
      %v1150 = vrot.slane %v1023, %v1149
      %vm1151 = vcmask 720512
      %v1152 = vsel %vm1151, %v1150, %v1145
      %v1153 = vadd.s32 %v1078, 4294967208
      %v1154 = vlaneseq
      %v1155 = vshrl.u32 %v1154, 7
      %v1156 = vsub.s32 %v1153, %v1155
      %v1157 = vrot.slane %v1024, %v1156
      %vm1158 = vcmask 786112
      %v1159 = vsel %vm1158, %v1157, %v1152
      %v1160 = vadd.s32 %v1078, 4294967200
      %v1161 = vlaneseq
      %v1162 = vshrl.u32 %v1161, 7
      %v1163 = vsub.s32 %v1160, %v1162
      %v1164 = vrot.slane %v1025, %v1163
      %vm1165 = vcmask 851712
      %v1166 = vsel %vm1165, %v1164, %v1159
      %v1167 = vadd.s32 %v1078, 4294967192
      %v1168 = vlaneseq
      %v1169 = vshrl.u32 %v1168, 7
      %v1170 = vsub.s32 %v1167, %v1169
      %v1171 = vrot.slane %v1026, %v1170
      %vm1172 = vcmask 917312
      %v1173 = vsel %vm1172, %v1171, %v1166
      %v1174 = vadd.s32 %v1078, 4294967184
      %v1175 = vlaneseq
      %v1176 = vshrl.u32 %v1175, 7
      %v1177 = vsub.s32 %v1174, %v1176
      %v1178 = vrot.slane %v1027, %v1177
      %vm1179 = vcmask 982912
      %v1180 = vsel %vm1179, %v1178, %v1173
      %v1181 = vadd.s32 %v1078, 4294967176
      %v1182 = vlaneseq
      %v1183 = vshrl.u32 %v1182, 7
      %v1184 = vsub.s32 %v1181, %v1183
      %v1185 = vrot.slane %v1028, %v1184
      %vm1186 = vcmask 1048512
      %v1187 = vsel %vm1186, %v1185, %v1180
      %v1188 = vlaneseq
      %v1189 = vshrl.u32 %v1188, 7
      %v1190 = vsub.s32 %v1078, %v1189
      %v1191 = vrot.slane %v1029, %v1190
      %v1192 = vlaneseq
      %v1193 = vshrl.u32 %v1192, 7
      %v1194 = vsub.s32 %v1083, %v1193
      %v1195 = vrot.slane %v1030, %v1194
      %v1196 = vsel %vm1088, %v1195, %v1191
      %v1197 = vlaneseq
      %v1198 = vshrl.u32 %v1197, 7
      %v1199 = vsub.s32 %v1090, %v1198
      %v1200 = vrot.slane %v1031, %v1199
      %v1201 = vsel %vm1095, %v1200, %v1196
      %v1202 = vlaneseq
      %v1203 = vshrl.u32 %v1202, 7
      %v1204 = vsub.s32 %v1097, %v1203
      %v1205 = vrot.slane %v1032, %v1204
      %v1206 = vsel %vm1102, %v1205, %v1201
      %v1207 = vlaneseq
      %v1208 = vshrl.u32 %v1207, 7
      %v1209 = vsub.s32 %v1104, %v1208
      %v1210 = vrot.slane %v1033, %v1209
      %v1211 = vsel %vm1109, %v1210, %v1206
      %v1212 = vlaneseq
      %v1213 = vshrl.u32 %v1212, 7
      %v1214 = vsub.s32 %v1111, %v1213
      %v1215 = vrot.slane %v1034, %v1214
      %v1216 = vsel %vm1116, %v1215, %v1211
      %v1217 = vlaneseq
      %v1218 = vshrl.u32 %v1217, 7
      %v1219 = vsub.s32 %v1118, %v1218
      %v1220 = vrot.slane %v1035, %v1219
      %v1221 = vsel %vm1123, %v1220, %v1216
      %v1222 = vlaneseq
      %v1223 = vshrl.u32 %v1222, 7
      %v1224 = vsub.s32 %v1125, %v1223
      %v1225 = vrot.slane %v1036, %v1224
      %v1226 = vsel %vm1130, %v1225, %v1221
      %v1227 = vlaneseq
      %v1228 = vshrl.u32 %v1227, 7
      %v1229 = vsub.s32 %v1132, %v1228
      %v1230 = vrot.slane %v1037, %v1229
      %v1231 = vsel %vm1137, %v1230, %v1226
      %v1232 = vlaneseq
      %v1233 = vshrl.u32 %v1232, 7
      %v1234 = vsub.s32 %v1139, %v1233
      %v1235 = vrot.slane %v1038, %v1234
      %v1236 = vsel %vm1144, %v1235, %v1231
      %v1237 = vlaneseq
      %v1238 = vshrl.u32 %v1237, 7
      %v1239 = vsub.s32 %v1146, %v1238
      %v1240 = vrot.slane %v1039, %v1239
      %v1241 = vsel %vm1151, %v1240, %v1236
      %v1242 = vlaneseq
      %v1243 = vshrl.u32 %v1242, 7
      %v1244 = vsub.s32 %v1153, %v1243
      %v1245 = vrot.slane %v1040, %v1244
      %v1246 = vsel %vm1158, %v1245, %v1241
      %v1247 = vlaneseq
      %v1248 = vshrl.u32 %v1247, 7
      %v1249 = vsub.s32 %v1160, %v1248
      %v1250 = vrot.slane %v1041, %v1249
      %v1251 = vsel %vm1165, %v1250, %v1246
      %v1252 = vlaneseq
      %v1253 = vshrl.u32 %v1252, 7
      %v1254 = vsub.s32 %v1167, %v1253
      %v1255 = vrot.slane %v1042, %v1254
      %v1256 = vsel %vm1172, %v1255, %v1251
      %v1257 = vlaneseq
      %v1258 = vshrl.u32 %v1257, 7
      %v1259 = vsub.s32 %v1174, %v1258
      %v1260 = vrot.slane %v1043, %v1259
      %v1261 = vsel %vm1179, %v1260, %v1256
      %v1262 = vlaneseq
      %v1263 = vshrl.u32 %v1262, 7
      %v1264 = vsub.s32 %v1181, %v1263
      %v1265 = vrot.slane %v1044, %v1264
      %v1266 = vsel %vm1186, %v1265, %v1261
      %vm1267 = vcmask 1041409
      %v1268 = vsel %vm1267, %v1266, %v1187
      %1270 = vst [vmem:[#allocation4] sm:$0x3] %v1268
    $region53: #{autoencoder_forward.1} parent=1 // pred_fallthru
      _
    // Predicated region
    $region54: #{autoencoder_forward.1} parent=1 // pred_check
      _
    $region55: #{autoencoder_forward.1} parent=1 // pred_check_branch
      %1272 = sbr.rel (0) target = $region57
    $region56: #{autoencoder_forward.1} parent=1 // pred_region
      %s1274 = ssub.s32 32, 32
      %1275 = vsyncadd [#allocation5], %s1274
      %s1277 = sshll.u32 [#allocation4], 4
      %s1278 = int_to_ptr.vmem [resolvable:$true] %s1277
      %1280 = dma.vmem_to_hbm [thread:$0]  %s1278, 32, %s11, [#allocation5]
    $region57: #{autoencoder_forward.1} parent=1 // pred_fallthru
      _
    // Predicated region
    $region58: #{autoencoder_forward.1} parent=1 // pred_check
      _
    $region59: #{autoencoder_forward.1} parent=1 // pred_check_branch
      %1282 = sbr.rel (0) target = $region61
    $region60: #{autoencoder_forward.1} parent=1 // pred_region
      %s1284 = ssub.s32 32, 32
      %1285 = vsyncadd [#allocation7], %s1284
      %s1287 = sshll.u32 [#allocation6], 4
      %s1288 = int_to_ptr.vmem [resolvable:$true] %s1287
      %1290 = dma.vmem_to_hbm [thread:$0]  %s1288, 32, %s12, [#allocation7]
    $region61: #{autoencoder_forward.1} parent=1 // pred_fallthru
      _
    // Predicated region
    $region62: #{autoencoder_forward.1} parent=1 // pred_check
      _
    $region63: #{autoencoder_forward.1} parent=1 // pred_check_branch
      %1292 = sbr.rel (0) target = $region65
    $region64: #{autoencoder_forward.1} parent=1 // pred_region
      %1293 = dma.done [#allocation5], 32
    $region65: #{autoencoder_forward.1} parent=1 // pred_fallthru
      _
    // Predicated region
    $region66: #{autoencoder_forward.1} parent=1 // pred_check
      _
    $region67: #{autoencoder_forward.1} parent=1 // pred_check_branch
      %1295 = sbr.rel (0) target = $region69
    $region68: #{autoencoder_forward.1} parent=1 // pred_region
      %1296 = dma.done [#allocation7], 32
    $region69: #{autoencoder_forward.1} parent=1 // pred_fallthru
      _
    %1297 = vsyncpa [#allocation5], 1
    %1298 = vsyncpa [#allocation7], 1

</llo_original>
